<compile_context>
chip_gen: v6e
topology: v6e:2x2x1
jax: 0.10.0
libtpu: 0.0.40
codegen_flags: <defaults>
</compile_context>

<pallas_src>
import functools

import jax
import jax.numpy as jnp
from jax.experimental import pallas as pl
from jax.experimental.pallas import tpu as pltpu

# ---- config mirrored from the PyTorch module --------------------------------
ZONE_FOCUS_METHOD = "masking"
MASKING_STRATEGY = "attention"     # 'zero' or 'attention'
ATTENTION_STRENGTH = 0.85
USE_SEGMENTATION_MASKING = False   # file_ids=None -> grid-only masks
N_ZONES = 6
N_CLASSES_PER_ZONE = 5
BACKBONE_OUT_DIM = 64              # synthetic backbone feature dim

# ---- K-tiling knobs ----------------------------------------------------------
MAX_TK = 8192                      # large K tile: few grid steps, ~1 MiB/buffer
TILES_PER_ZONE_TARGET = 4          # aim for a handful of K steps per zone


def _round_up(a: int, b: int) -> int:
    return -(-a // b) * b


def _zone_bounds(height: int, width: int):
    """Static (r0, r1, c0, c1) bounds of the 6 grid zones (module ordering)."""
    h_third = height // 3
    w_half = width // 2
    row_ranges = [(0, h_third), (h_third, 2 * h_third), (2 * h_third, height)]
    col_ranges = [(0, w_half), (w_half, width)]
    return [(r0, r1, c0, c1) for (r0, r1) in row_ranges for (c0, c1) in col_ranges]


def _mask_weights():
    if MASKING_STRATEGY == "zero":
        return 1.0, 0.0
    s = float(ATTENTION_STRENGTH)
    return s, 1.0 - s


def _pick_tk(C: int, H: int, W: int) -> int:
    """K-tile size: multiple of 128, ~TILES_PER_ZONE_TARGET tiles per zone."""
    kz_max = max(C * (r1 - r0) * (c1 - c0) for r0, r1, c0, c1 in _zone_bounds(H, W))
    tk = _round_up(-(-kz_max // TILES_PER_ZONE_TARGET), 128)
    return int(min(max(tk, 128), MAX_TK))


def build_grid_zone_masks(height: int, width: int) -> jnp.ndarray:
    """Grid zone masks [6, H, W] (used only by the pure-JAX reference)."""
    rows = jnp.arange(height)[:, None]
    cols = jnp.arange(width)[None, :]
    masks = []
    for r0, r1, c0, c1 in _zone_bounds(height, width):
        m = (rows >= r0) & (rows < r1) & (cols >= c0) & (cols < c1)
        masks.append(m.astype(jnp.float32))
    return jnp.stack(masks, axis=0)


# =============================== kernels ======================================

def _zone_partial_kernel(x_ref, wb_ref, p_ref):
    """Accumulate P_z += x_tile @ Wb_tile over the current zone's K tiles.

    x_ref : (B, TK)   bf16   zone-sorted, zero-padded input tile
    wb_ref: (TK, D)   bf16   matching backbone-weight tile (zero rows = padding)
    p_ref : (1, B, D) f32    per-zone partial feature block (resident across K)
    """
    @pl.when(pl.program_id(1) == 0)
    def _():
        p_ref[...] = jnp.zeros_like(p_ref)

    p_ref[...] += jnp.dot(x_ref[...], wb_ref[...],
                          preferred_element_type=jnp.float32)[None]


def _zone_head_kernel(p_ref, wc_ref, bc_ref, bb_ref, out_ref, *, w_in, w_out):
    """Tiny epilogue: recombine partials into per-zone features + classifiers.

    p_ref : (6, B, D)  f32   per-zone partial features P_z
    wc_ref: (6, D, NC) f32   per-zone classifier weights
    bc_ref: (1, 6, NC) f32   per-zone classifier biases
    bb_ref: (1, 1, D)  f32   backbone bias
    out_ref:(B, 6, NC) f32   logits
    """
    p = p_ref[...]                                             # (6, B, D)
    total = jnp.sum(p, axis=0, keepdims=True)                  # (1, B, D)
    # feat_z = w_in * P_z + w_out * (T - P_z) + bb   (masking applied in f32)
    feats = (w_in - w_out) * p + w_out * total + bb_ref[...]   # (6, B, D)
    # one batched contraction instead of 6 tiny matmuls: 'zbd,zdc->zbc'
    logits = jax.lax.dot_general(
        feats, wc_ref[...],
        dimension_numbers=(((2,), (1,)), ((0,), (0,))),
        preferred_element_type=jnp.float32)                    # (6, B, NC)
    outs = [logits[z] for z in range(logits.shape[0])]         # 6 x (B, NC)
    out_ref[...] = jnp.stack(outs, axis=1) + bc_ref[...]       # (B, 6, NC)


# =============================== wrappers =====================================

def prepare_params(wb, bb, wc, bc, C, H, W):
    """One-time parameter prep (OUTSIDE jit): zone-sort, zero-pad, bf16-cast Wb."""
    D = wb.shape[1]
    tk = _pick_tk(C, H, W)
    bounds = _zone_bounds(H, W)
    kz = [C * (r1 - r0) * (c1 - c0) for r0, r1, c0, c1 in bounds]
    tpz = max(-(-k // tk) for k in kz)          # equal #tiles per zone
    kz_pad = tpz * tk

    wb4 = wb.reshape(C, H, W, D)
    segs = []
    for (r0, r1, c0, c1), k in zip(bounds, kz):
        seg = wb4[:, r0:r1, c0:c1, :].reshape(k, D)
        seg = jnp.pad(seg, ((0, kz_pad - k), (0, 0)))   # zero rows -> no contribution
        segs.append(seg)
    wb_perm = jnp.concatenate(segs, axis=0).astype(jnp.bfloat16)   # (6*kz_pad, D)

    params = {
        "wb": wb_perm,
        "bb": bb.reshape(1, 1, D).astype(jnp.float32),
        "wc": wc.astype(jnp.float32),
        "bc": bc.reshape(1, N_ZONES, -1).astype(jnp.float32),
    }
    return params, tk


@functools.partial(jax.jit, static_argnames=("tk",))
def csi_forward(x, params, *, tk):
    """x: [B, C, H, W] f32 -> logits [B, 6, n_classes_per_zone] f32."""
    B, C, H, W = x.shape
    wb = params["wb"]
    K_pad, D = wb.shape
    NC = params["wc"].shape[2]
    tpz = K_pad // (N_ZONES * tk)               # static at trace time
    kz_pad = tpz * tk
    w_in, w_out = _mask_weights()

    # Zone-sort + zero-pad the input pixels to match the prepared Wb layout.
    segs = []
    for r0, r1, c0, c1 in _zone_bounds(H, W):
        seg = x[:, :, r0:r1, c0:c1].reshape(B, -1)
        segs.append(jnp.pad(seg, ((0, 0), (0, kz_pad - seg.shape[1]))))
    x_perm = jnp.concatenate(segs, axis=1).astype(jnp.bfloat16)    # (B, K_pad)

    # Explicit VMEM budget: double-buffered bf16 x/Wb tiles + f32 P block.
    vmem_bytes = (2 * 2 * (B * tk + tk * D)    # 2 buffers x bf16 tiles
                  + 2 * 4 * B * D              # 2 buffers x f32 output block
                  + (4 << 20))                 # headroom
    vmem_limit = int(min(max(vmem_bytes, 16 << 20), 48 << 20))  # v7x-safe cap

    cost = pl.CostEstimate(
        flops=2 * B * K_pad * D,
        transcendentals=0,
        bytes_accessed=B * K_pad * 2 + K_pad * D * 2 + N_ZONES * B * D * 4)

    # ---- kernel 1: per-zone partial backbone features ------------------------
    p = pl.pallas_call(
        _zone_partial_kernel,
        out_shape=jax.ShapeDtypeStruct((N_ZONES, B, D), jnp.float32),
        grid=(N_ZONES, tpz),
        in_specs=[
            pl.BlockSpec((B, tk), lambda z, t: (0, z * tpz + t)),
            pl.BlockSpec((tk, D), lambda z, t: (z * tpz + t, 0)),
        ],
        out_specs=pl.BlockSpec((1, B, D), lambda z, t: (z, 0, 0)),
        compiler_params=pltpu.CompilerParams(
            dimension_semantics=("parallel", "arbitrary"),
            vmem_limit_bytes=vmem_limit),
        cost_estimate=cost,
    )(x_perm, wb)

    # ---- kernel 2: tiny epilogue (recombination + classifier heads) ----------
    out = pl.pallas_call(
        functools.partial(_zone_head_kernel, w_in=w_in, w_out=w_out),
        out_shape=jax.ShapeDtypeStruct((B, N_ZONES, NC), jnp.float32),
        grid=(1,),
        in_specs=[
            pl.BlockSpec((N_ZONES, B, D), lambda i: (0, 0, 0)),
            pl.BlockSpec((N_ZONES, D, NC), lambda i: (0, 0, 0)),
            pl.BlockSpec((1, N_ZONES, NC), lambda i: (0, 0, 0)),
            pl.BlockSpec((1, 1, D), lambda i: (0, 0, 0)),
        ],
        out_specs=pl.BlockSpec((B, N_ZONES, NC), lambda i: (0, 0, 0)),
    )(p, params["wc"], params["bc"], params["bb"])

    return out                                                  # [B, 6, NC]


def reference_forward(x, wb, bb, wc, bc):
    """Pure-JAX f32 reference mirroring the PyTorch forward (masking path)."""
    B, C, H, W = x.shape
    masks = build_grid_zone_masks(H, W)                         # [6, H, W]
    outs = []
    for z in range(N_ZONES):
        m = masks[z][None, None, :, :]
        if MASKING_STRATEGY == "zero":
            w = m
        else:
            s = ATTENTION_STRENGTH
            w = m * s + (1.0 - m) * (1.0 - s)
        xm = x * w
        feats = xm.reshape(B, -1) @ wb + bb                     # synthetic backbone
        logits = feats @ wc[z] + bc[z]
        outs.append(logits)
    return jnp.stack(outs, axis=1)                              # [B, 6, NC]


if __name__ == "__main__":
    # small shapes consistent with the module's forward
    B, C, H, W = 2, 4, 16, 16
    CHW = C * H * W
    D = BACKBONE_OUT_DIM
    NC = N_CLASSES_PER_ZONE

    key = jax.random.PRNGKey(0)
    kx, kwb, kbb, kwc, kbc = jax.random.split(key, 5)

    x = jax.random.normal(kx, (B, C, H, W), dtype=jnp.float32)

    # deterministic synthetic parameters (stand-in for backbone + CSIHead)
    wb = 0.02 * jax.random.normal(kwb, (CHW, D), dtype=jnp.float32)
    bb = 0.01 * jax.random.normal(kbb, (D,), dtype=jnp.float32)
    wc = 0.05 * jax.random.normal(kwc, (N_ZONES, D, NC), dtype=jnp.float32)
    bc = 0.01 * jax.random.normal(kbc, (N_ZONES, NC), dtype=jnp.float32)

    params, tk = prepare_params(wb, bb, wc, bc, C, H, W)        # one-time prep
    out = jax.block_until_ready(csi_forward(x, params, tk=tk))
    assert out.shape == (B, N_ZONES, NC), out.shape

    ref = reference_forward(x, wb, bb, wc, bc)
    assert jnp.all(jnp.isfinite(out))
    max_err = float(jnp.max(jnp.abs(out - ref)))
    # bf16 x / Wb on the MXU -> ~1% relative error vs the f32 reference.
    assert jnp.allclose(out, ref, rtol=2e-2, atol=2e-2), max_err

    print("KERNEL_OK")
</pallas_src>

<mosaic_0001>
module attributes {stable_mosaic.version = 11 : i64} {
  func.func @_zone_head_kernel(%arg0: i32, %arg1: memref<6x2x64xf32, #tpu.memory_space<vmem>>, %arg2: memref<6x64x5xf32, #tpu.memory_space<vmem>>, %arg3: memref<1x6x5xf32, #tpu.memory_space<vmem>>, %arg4: memref<1x1x64xf32, #tpu.memory_space<vmem>>, %arg5: memref<2x6x5xf32, #tpu.memory_space<vmem>>) attributes {dimension_semantics = [#tpu.dimension_semantics<arbitrary>], iteration_bounds = array<i64: 1>, scalar_prefetch = 0 : i64, scratch_operands = 0 : i64, tpu.core_type = #tpu.core_type<tc>, window_params = [{pipeline_mode = #tpu.pipeline_mode<synchronous>, transform_indices = @transform_0, window_bounds = array<i64: 6, 2, 64>}, {pipeline_mode = #tpu.pipeline_mode<synchronous>, transform_indices = @transform_1, window_bounds = array<i64: 6, 64, 5>}, {pipeline_mode = #tpu.pipeline_mode<synchronous>, transform_indices = @transform_2, window_bounds = array<i64: 1, 6, 5>}, {pipeline_mode = #tpu.pipeline_mode<synchronous>, transform_indices = @transform_3, window_bounds = array<i64: 1, 1, 64>}, {pipeline_mode = #tpu.pipeline_mode<synchronous>, transform_indices = @transform_4, window_bounds = array<i64: 2, 6, 5>}]} {
    %c0 = arith.constant 0 : index
    %c0_0 = arith.constant 0 : index
    %c0_1 = arith.constant 0 : index
    %0 = vector.load %arg1[%c0, %c0_0, %c0_1] : memref<6x2x64xf32, #tpu.memory_space<vmem>>, vector<6x2x64xf32>
    %cst = arith.constant dense<0.000000e+00> : vector<2x64xf32>
    %1 = vector.multi_reduction <add>, %0, %cst [0] : vector<6x2x64xf32> to vector<2x64xf32>
    %2 = vector.shape_cast %1 : vector<2x64xf32> to vector<1x2x64xf32>
    %cst_2 = arith.constant 0.699999988 : f32
    %3 = vector.broadcast %cst_2 : f32 to vector<6x2x64xf32>
    %4 = arith.mulf %3, %0 : vector<6x2x64xf32>
    %cst_3 = arith.constant 1.500000e-01 : f32
    %5 = vector.broadcast %cst_3 : f32 to vector<1x2x64xf32>
    %6 = arith.mulf %5, %2 : vector<1x2x64xf32>
    %7 = vector.broadcast %6 : vector<1x2x64xf32> to vector<6x2x64xf32>
    %8 = arith.addf %4, %7 : vector<6x2x64xf32>
    %c0_4 = arith.constant 0 : index
    %c0_5 = arith.constant 0 : index
    %c0_6 = arith.constant 0 : index
    %9 = vector.load %arg4[%c0_4, %c0_5, %c0_6] : memref<1x1x64xf32, #tpu.memory_space<vmem>>, vector<1x1x64xf32>
    %10 = vector.broadcast %9 : vector<1x1x64xf32> to vector<6x2x64xf32>
    %11 = arith.addf %8, %10 : vector<6x2x64xf32>
    %c0_7 = arith.constant 0 : index
    %c0_8 = arith.constant 0 : index
    %c0_9 = arith.constant 0 : index
    %12 = vector.load %arg2[%c0_7, %c0_8, %c0_9] : memref<6x64x5xf32, #tpu.memory_space<vmem>>, vector<6x64x5xf32>
    %cst_10 = arith.constant dense<0.000000e+00> : vector<6x2x5xf32>
    %13 = tpu.matmul %11, %12, %cst_10 {dimension_numbers = #tpu.dot_dimension_numbers<[2], [1], [1], [2], [0, 0, 0, 1, 1, 2], [0], [0]>} : vector<6x2x64xf32>, vector<6x64x5xf32>, vector<6x2x5xf32> -> vector<6x2x5xf32>
    %14 = vector.extract_strided_slice %13 {offsets = [0, 0, 0], sizes = [1, 2, 5], strides = [1, 1, 1]} : vector<6x2x5xf32> to vector<1x2x5xf32>
    %15 = vector.shape_cast %14 : vector<1x2x5xf32> to vector<2x5xf32>
    %16 = vector.extract_strided_slice %13 {offsets = [1, 0, 0], sizes = [1, 2, 5], strides = [1, 1, 1]} : vector<6x2x5xf32> to vector<1x2x5xf32>
    %17 = vector.shape_cast %16 : vector<1x2x5xf32> to vector<2x5xf32>
    %18 = vector.extract_strided_slice %13 {offsets = [2, 0, 0], sizes = [1, 2, 5], strides = [1, 1, 1]} : vector<6x2x5xf32> to vector<1x2x5xf32>
    %19 = vector.shape_cast %18 : vector<1x2x5xf32> to vector<2x5xf32>
    %20 = vector.extract_strided_slice %13 {offsets = [3, 0, 0], sizes = [1, 2, 5], strides = [1, 1, 1]} : vector<6x2x5xf32> to vector<1x2x5xf32>
    %21 = vector.shape_cast %20 : vector<1x2x5xf32> to vector<2x5xf32>
    %22 = vector.extract_strided_slice %13 {offsets = [4, 0, 0], sizes = [1, 2, 5], strides = [1, 1, 1]} : vector<6x2x5xf32> to vector<1x2x5xf32>
    %23 = vector.shape_cast %22 : vector<1x2x5xf32> to vector<2x5xf32>
    %24 = vector.extract_strided_slice %13 {offsets = [5, 0, 0], sizes = [1, 2, 5], strides = [1, 1, 1]} : vector<6x2x5xf32> to vector<1x2x5xf32>
    %25 = vector.shape_cast %24 : vector<1x2x5xf32> to vector<2x5xf32>
    %26 = vector.shape_cast %15 : vector<2x5xf32> to vector<2x1x5xf32>
    %27 = vector.shape_cast %17 : vector<2x5xf32> to vector<2x1x5xf32>
    %28 = vector.shape_cast %19 : vector<2x5xf32> to vector<2x1x5xf32>
    %29 = vector.shape_cast %21 : vector<2x5xf32> to vector<2x1x5xf32>
    %30 = vector.shape_cast %23 : vector<2x5xf32> to vector<2x1x5xf32>
    %31 = vector.shape_cast %25 : vector<2x5xf32> to vector<2x1x5xf32>
    %32 = tpu.concatenate %26, %27, %28, %29, %30, %31 in 1 : vector<2x1x5xf32>, vector<2x1x5xf32>, vector<2x1x5xf32>, vector<2x1x5xf32>, vector<2x1x5xf32>, vector<2x1x5xf32> -> vector<2x6x5xf32>
    %c0_11 = arith.constant 0 : index
    %c0_12 = arith.constant 0 : index
    %c0_13 = arith.constant 0 : index
    %33 = vector.load %arg3[%c0_11, %c0_12, %c0_13] : memref<1x6x5xf32, #tpu.memory_space<vmem>>, vector<1x6x5xf32>
    %34 = vector.broadcast %33 : vector<1x6x5xf32> to vector<2x6x5xf32>
    %35 = arith.addf %32, %34 : vector<2x6x5xf32>
    %c0_14 = arith.constant 0 : index
    %c0_15 = arith.constant 0 : index
    %c0_16 = arith.constant 0 : index
    %36 = vector.load %arg5[%c0_14, %c0_15, %c0_16] : memref<2x6x5xf32, #tpu.memory_space<vmem>>, vector<2x6x5xf32>
    tpu.vector_store %arg5[%c0_14, %c0_15, %c0_16], %35 {strides = array<i32>} : memref<2x6x5xf32, #tpu.memory_space<vmem>>, vector<2x6x5xf32>,
    return
  }
  func.func @transform_0(%arg0: i32) -> (i32, i32, i32) {
    %c0_i32 = arith.constant 0 : i32
    %c0_i32_0 = arith.constant 0 : i32
    %c0_i32_1 = arith.constant 0 : i32
    %c0_i32_2 = arith.constant 0 : i32
    return %c0_i32, %c0_i32_0, %c0_i32_1 : i32, i32, i32
  }
  func.func @transform_1(%arg0: i32) -> (i32, i32, i32) {
    %c0_i32 = arith.constant 0 : i32
    %c0_i32_0 = arith.constant 0 : i32
    %c0_i32_1 = arith.constant 0 : i32
    %c0_i32_2 = arith.constant 0 : i32
    return %c0_i32, %c0_i32_0, %c0_i32_1 : i32, i32, i32
  }
  func.func @transform_2(%arg0: i32) -> (i32, i32, i32) {
    %c0_i32 = arith.constant 0 : i32
    %c0_i32_0 = arith.constant 0 : i32
    %c0_i32_1 = arith.constant 0 : i32
    %c0_i32_2 = arith.constant 0 : i32
    return %c0_i32, %c0_i32_0, %c0_i32_1 : i32, i32, i32
  }
  func.func @transform_3(%arg0: i32) -> (i32, i32, i32) {
    %c0_i32 = arith.constant 0 : i32
    %c0_i32_0 = arith.constant 0 : i32
    %c0_i32_1 = arith.constant 0 : i32
    %c0_i32_2 = arith.constant 0 : i32
    return %c0_i32, %c0_i32_0, %c0_i32_1 : i32, i32, i32
  }
  func.func @transform_4(%arg0: i32) -> (i32, i32, i32) {
    %c0_i32 = arith.constant 0 : i32
    %c0_i32_0 = arith.constant 0 : i32
    %c0_i32_1 = arith.constant 0 : i32
    %c0_i32_2 = arith.constant 0 : i32
    return %c0_i32, %c0_i32_0, %c0_i32_1 : i32, i32, i32
  }
}

module attributes {stable_mosaic.version = 11 : i64} {
  func.func @_zone_partial_kernel(%arg0: i32, %arg1: i32, %arg2: memref<2x128xbf16, #tpu.memory_space<vmem>>, %arg3: memref<128x64xbf16, #tpu.memory_space<vmem>>, %arg4: memref<1x2x64xf32, #tpu.memory_space<vmem>>) attributes {dimension_semantics = [#tpu.dimension_semantics<parallel>, #tpu.dimension_semantics<arbitrary>], iteration_bounds = array<i64: 6, 2>, scalar_prefetch = 0 : i64, scratch_operands = 0 : i64, tpu.core_type = #tpu.core_type<tc>, window_params = [{transform_indices = @transform_0, window_bounds = array<i64: 2, 128>}, {transform_indices = @transform_1, window_bounds = array<i64: 128, 64>}, {transform_indices = @transform_2, window_bounds = array<i64: 1, 2, 64>}]} {
    %c0_i32 = arith.constant 0 : i32
    %0 = arith.cmpi eq, %arg1, %c0_i32 : i32
    %1 = arith.extui %0 : i1 to i32
    %c0_i32_0 = arith.constant 0 : i32
    %2 = arith.cmpi ne, %1, %c0_i32_0 : i32
    scf.if %2 {
      %cst_10 = arith.constant 0.000000e+00 : f32
      %10 = vector.broadcast %cst_10 : f32 to vector<1x2x64xf32>
      %c0_11 = arith.constant 0 : index
      %c0_12 = arith.constant 0 : index
      %c0_13 = arith.constant 0 : index
      %11 = vector.load %arg4[%c0_11, %c0_12, %c0_13] : memref<1x2x64xf32, #tpu.memory_space<vmem>>, vector<1x2x64xf32>
      tpu.vector_store %arg4[%c0_11, %c0_12, %c0_13], %10 {strides = array<i32>} : memref<1x2x64xf32, #tpu.memory_space<vmem>>, vector<1x2x64xf32>,
    } else {
    }
    %c0 = arith.constant 0 : index
    %c0_1 = arith.constant 0 : index
    %c0_2 = arith.constant 0 : index
    %3 = vector.load %arg4[%c0, %c0_1, %c0_2] : memref<1x2x64xf32, #tpu.memory_space<vmem>>, vector<1x2x64xf32>
    %c0_3 = arith.constant 0 : index
    %c0_4 = arith.constant 0 : index
    %4 = vector.load %arg2[%c0_3, %c0_4] : memref<2x128xbf16, #tpu.memory_space<vmem>>, vector<2x128xbf16>
    %c0_5 = arith.constant 0 : index
    %c0_6 = arith.constant 0 : index
    %5 = vector.load %arg3[%c0_5, %c0_6] : memref<128x64xbf16, #tpu.memory_space<vmem>>, vector<128x64xbf16>
    %cst = arith.constant dense<0.000000e+00> : vector<2x64xf32>
    %6 = tpu.matmul %4, %5, %cst {dimension_numbers = #tpu.dot_dimension_numbers<[1], [0], [0], [1], [0, 0, 1, 1], [], []>} : vector<2x128xbf16>, vector<128x64xbf16>, vector<2x64xf32> -> vector<2x64xf32>
    %7 = vector.shape_cast %6 : vector<2x64xf32> to vector<1x2x64xf32>
    %8 = arith.addf %3, %7 : vector<1x2x64xf32>
    %c0_7 = arith.constant 0 : index
    %c0_8 = arith.constant 0 : index
    %c0_9 = arith.constant 0 : index
    %9 = vector.load %arg4[%c0_7, %c0_8, %c0_9] : memref<1x2x64xf32, #tpu.memory_space<vmem>>, vector<1x2x64xf32>
    tpu.vector_store %arg4[%c0_7, %c0_8, %c0_9], %8 {strides = array<i32>} : memref<1x2x64xf32, #tpu.memory_space<vmem>>, vector<1x2x64xf32>,
    return
  }
  func.func @transform_0(%arg0: i32, %arg1: i32) -> (i32, i32) {
    %c2_i32 = arith.constant 2 : i32
    %0 = arith.muli %arg0, %c2_i32 : i32
    %1 = arith.addi %0, %arg1 : i32
    %c0_i32 = arith.constant 0 : i32
    %c0_i32_0 = arith.constant 0 : i32
    return %c0_i32, %1 : i32, i32
  }
  func.func @transform_1(%arg0: i32, %arg1: i32) -> (i32, i32) {
    %c2_i32 = arith.constant 2 : i32
    %0 = arith.muli %arg0, %c2_i32 : i32
    %1 = arith.addi %0, %arg1 : i32
    %c0_i32 = arith.constant 0 : i32
    %c0_i32_0 = arith.constant 0 : i32
    return %1, %c0_i32 : i32, i32
  }
  func.func @transform_2(%arg0: i32, %arg1: i32) -> (i32, i32, i32) {
    %c0_i32 = arith.constant 0 : i32
    %c0_i32_0 = arith.constant 0 : i32
    %c0_i32_1 = arith.constant 0 : i32
    return %arg0, %c0_i32, %c0_i32_0 : i32, i32, i32
  }
}

</mosaic_0001>

<llo_original>
// kernel: csi_forward.2
$region0: #{csi_forward.2}
  #allocation0 [shape = 'u32[]', space=smem, size = 0x4, offset = 0x4, fixed_abs, tag = 'smem constant byte address 0x4 - core index']
  #allocation1 [shape = 'u32[144,128]{1,0:T(1,128)}', space=vmem, size = 0x12000, scoped, tag = 'internal scratch']
  %s0 = inlined_call_operand.vmem [shape: bf16[2,1536], index: 0, kind: input, shape index: {}]
  %s1 = inlined_call_operand.vmem [shape: bf16[1536,64], index: 1, kind: input, shape index: {}]
  %s2 = inlined_call_operand.vmem [shape: f32[6,2,64], index: 2, kind: output, shape index: {}]
  %s3 = sld [smem:[#allocation0]]
  $region45: #{csi_forward.2} parent=0
    _
  %s5 = ssub.s32 1, %s3
  %s6 = scalar_select 0, %s5, %s3
  loop: start=0, step=1, limit=14
  $region2: #{csi_forward.2} parent=0 // loop_pre_header
    _
  $region3: #{csi_forward.2} parent=0 // loop_header
    %s8 = sphi 0, %s12
    %p9 = scmp.ge.s32.totalorder %s8, 14
    %s15 = sphi 0, %s27
    %s16 = sphi 0, %s23
    %s17 = sphi 0, %s15
    %s18 = sphi 0, %s16
    %s19 = sphi 0, %s17
    %s20 = sphi 0, %s18
    %s34 = sphi 0, %s36
    %s37 = sphi 0, %s34
    %s38 = sphi 0, %s37
    %s54 = sphi 0, %s38
    %s64 = sphi 0, %s66
    %s67 = sphi 0, %s64
    %s68 = sphi 0, %s67
    %s84 = sphi 0, %s68
    %s90 = sphi 0, %s92
    %s93 = sphi 0, %s90
    %s94 = sphi 0, %s93
    %s110 = sphi 0, %s94
  $region4: #{csi_forward.2} parent=0 // loop_header_branch
    %11 = sbr.rel (%p9) target = $region8
  $region5: #{csi_forward.2} parent=0 // loop_body
    %s13 = ssub.s32 %s8, 1
    %s14 = ssub.s32 %s8, 2
    %s21 = sadd.s32 1, %s16
    %p22 = scmp.ge.s32.totalorder %s21, 2
    %s23 = scalar_select %p22, 0, %s21
    %s24 = sadd.s32 1, %s15
    %s25 = scalar_select %p22, %s24, %s15
    %p26 = scmp.ge.s32.totalorder %s25, 6
    %s27 = scalar_select %p26, 0, %s25
    %s28 = smul.u32 %s15, 2
    %s29 = sadd.s32 %s28, %s16
    %s30 = smul.u32 %s27, 2
    %s31 = sadd.s32 %s30, %s23
    %s32 = ssub.s32 %s29, %s31
    %p33 = scmp.eq.s32.totalorder %s32, 0
    %s35 = sadd.s32 %s34, 1
    %s36 = scalar_select %p33, %s34, %s35
    %p39 = pneg %p33
    %p40 = scmp.eq.s32.totalorder %s8, 11
    %p41 = por %p39, %p40
    %p42 = scmp.ne.s32.totalorder %s34, %s37
    %p43 = scmp.eq.s32.totalorder %s8, 0
    %p44 = por %p42, %p43
    %p45 = scmp.ne.s32.totalorder %s34, %s37
    %p46 = scmp.eq.s32.totalorder %s13, 11
    %p47 = por %p45, %p46
    %p48 = scmp.ne.s32.totalorder %s37, %s38
    %p49 = scmp.eq.s32.totalorder %s13, 0
    %p50 = por %p48, %p49
    %p51 = scmp.ne.s32.totalorder %s37, %s38
    %p52 = scmp.eq.s32.totalorder %s14, 11
    %p53 = por %p51, %p52
    %p55 = scmp.ne.s32.totalorder %s38, %s54
    %p56 = scmp.eq.s32.totalorder %s14, 0
    %p57 = por %p55, %p56
    %s58 = smul.u32 %s15, 2
    %s59 = sadd.s32 %s58, %s16
    %s60 = smul.u32 %s27, 2
    %s61 = sadd.s32 %s60, %s23
    %s62 = ssub.s32 %s59, %s61
    %p63 = scmp.eq.s32.totalorder %s62, 0
    %s65 = sadd.s32 %s64, 1
    %s66 = scalar_select %p63, %s64, %s65
    %p69 = pneg %p63
    %p70 = scmp.eq.s32.totalorder %s8, 11
    %p71 = por %p69, %p70
    %p72 = scmp.ne.s32.totalorder %s64, %s67
    %p73 = scmp.eq.s32.totalorder %s8, 0
    %p74 = por %p72, %p73
    %p75 = scmp.ne.s32.totalorder %s64, %s67
    %p76 = scmp.eq.s32.totalorder %s13, 11
    %p77 = por %p75, %p76
    %p78 = scmp.ne.s32.totalorder %s67, %s68
    %p79 = scmp.eq.s32.totalorder %s13, 0
    %p80 = por %p78, %p79
    %p81 = scmp.ne.s32.totalorder %s67, %s68
    %p82 = scmp.eq.s32.totalorder %s14, 11
    %p83 = por %p81, %p82
    %p85 = scmp.ne.s32.totalorder %s68, %s84
    %p86 = scmp.eq.s32.totalorder %s14, 0
    %p87 = por %p85, %p86
    %s88 = ssub.s32 %s15, %s27
    %p89 = scmp.eq.s32.totalorder %s88, 0
    %s91 = sadd.s32 %s90, 1
    %s92 = scalar_select %p89, %s90, %s91
    %p95 = pneg %p89
    %p96 = scmp.eq.s32.totalorder %s8, 11
    %p97 = por %p95, %p96
    %p98 = scmp.ne.s32.totalorder %s90, %s93
    %p99 = scmp.eq.s32.totalorder %s8, 0
    %p100 = por %p98, %p99
    %p101 = scmp.ne.s32.totalorder %s90, %s93
    %p102 = scmp.eq.s32.totalorder %s13, 11
    %p103 = por %p101, %p102
    %p104 = scmp.ne.s32.totalorder %s93, %s94
    %p105 = scmp.eq.s32.totalorder %s13, 0
    %p106 = por %p104, %p105
    %p107 = scmp.ne.s32.totalorder %s93, %s94
    %p108 = scmp.eq.s32.totalorder %s14, 11
    %p109 = por %p107, %p108
    %p111 = scmp.ne.s32.totalorder %s94, %s110
    %p112 = scmp.eq.s32.totalorder %s14, 0
    %p113 = por %p111, %p112
    %p114 = scmp.le.s32.totalorder 1, %s8
    %p115 = scmp.lt.s32.totalorder %s8, 13
    %p116 = pnand %p114, %p115
    %p117 = pneg %p116
    // Predicated region
    $region9: #{csi_forward.2} parent=5 // pred_check
      _
    $region10: #{csi_forward.2} parent=5 // pred_check_branch
      %119 = sbr.rel (%p116) target = $region12
    $region11: #{csi_forward.2} parent=5 // pred_region
      %s120 = ssub.s32 %s8, 1
    $region12: #{csi_forward.2} parent=5 // pred_fallthru
      _
    %p121 = scmp.lt.s32.totalorder %s8, 12
    // Predicated region
    $region13: #{csi_forward.2} parent=5 // pred_check
      %p122 = pneg %p121
    $region14: #{csi_forward.2} parent=5 // pred_check_branch
      %124 = sbr.rel (%p122) target = $region16
    $region15: #{csi_forward.2} parent=5 // pred_region
      // Predicated region
      $region17: #{csi_forward.2} parent=15 // pred_check
        %p125 = pneg %p44
      $region18: #{csi_forward.2} parent=15 // pred_check_branch
        %127 = sbr.rel (%p125) target = $region20
      $region19: #{csi_forward.2} parent=15 // pred_region
        %s128 = smul.u32 %s15, 2
        %s129 = sadd.s32 %s128, %s16
        %p130 = scmp.lt.s32.totalorder %s129, 11
        %s131 = scalar_select %p130, %s129, 11
        %s132 = scalar_lea.vmem %s0, %s131
        %s133 = smul.u32 %s15, 2
        %s134 = sadd.s32 %s133, %s16
      $region20: #{csi_forward.2} parent=15 // pred_fallthru
        _
      // Predicated region
      $region21: #{csi_forward.2} parent=15 // pred_check
        %p135 = pneg %p74
      $region22: #{csi_forward.2} parent=15 // pred_check_branch
        %137 = sbr.rel (%p135) target = $region24
      $region23: #{csi_forward.2} parent=15 // pred_region
        %s138 = smul.u32 %s15, 2
        %s139 = sadd.s32 %s138, %s16
        %s140 = smul.u32 16, %s139
        %p141 = scmp.lt.s32.totalorder %s140, 191
        %s142 = scalar_select %p141, %s140, 191
        %s143 = smul.addr %s142, 4
        %s144 = scalar_lea.vmem %s1, %s143
        %s145 = smul.u32 %s15, 2
        %s146 = sadd.s32 %s145, %s16
        %s147 = smul.u32 16, %s146
      $region24: #{csi_forward.2} parent=15 // pred_fallthru
        _
    $region16: #{csi_forward.2} parent=5 // pred_fallthru
      _
    %p148 = scmp.le.s32.totalorder 1, %s8
    %p149 = scmp.lt.s32.totalorder %s8, 13
    %p150 = pnand %p148, %p149
    %p151 = pneg %p150
    // Predicated region
    $region25: #{csi_forward.2} parent=5 // pred_check
      _
    $region26: #{csi_forward.2} parent=5 // pred_check_branch
      %153 = sbr.rel (%p150) target = $region28
    $region27: #{csi_forward.2} parent=5 // pred_region
      %s154 = ssub.s32 %s8, 1
      %s155 = smul.u32 %s17, 2
      %s156 = sadd.s32 %s155, %s18
      %p157 = scmp.lt.s32.totalorder %s156, 11
      %s158 = scalar_select %p157, %s156, 11
      %s159 = scalar_lea.vmem %s0, %s158
      %p160 = pneg %p50
      %p161 = pneg %p47
      %s162 = smul.u32 %s17, 2
      %s163 = sadd.s32 %s162, %s18
      %s164 = smul.u32 16, %s163
      %p165 = scmp.lt.s32.totalorder %s164, 191
      %s166 = scalar_select %p165, %s164, 191
      %s167 = smul.addr %s166, 4
      %s168 = scalar_lea.vmem %s1, %s167
      %p169 = pneg %p80
      %p170 = pneg %p77
      %p171 = pneg %p106
      %p172 = pneg %p103
      %p173 = scmp.lt.s32.totalorder %s17, 5
      %s174 = scalar_select %p173, %s17, 5
      %s175 = smul.addr %s174, 2
      %s176 = scalar_lea.vmem %s2, %s175
      %s177 = smul.u32 %s17, 2
      %s178 = sadd.s32 %s177, %s18
      %p179 = scmp.lt.s32.totalorder %s178, 11
      %s180 = scalar_select %p179, %s178, 11
      %s181 = scalar_lea.vmem %s0, %s180
      %s182 = smul.u32 %s17, 2
      %s183 = sadd.s32 %s182, %s18
      %s184 = smul.u32 %s17, 2
      %s185 = sadd.s32 %s184, %s18
      %s186 = smul.u32 16, %s185
      %p187 = scmp.lt.s32.totalorder %s186, 191
      %s188 = scalar_select %p187, %s186, 191
      %s189 = smul.addr %s188, 4
      %s190 = scalar_lea.vmem %s1, %s189
      %s191 = smul.u32 %s17, 2
      %s192 = sadd.s32 %s191, %s18
      %s193 = smul.u32 16, %s192
      %p194 = scmp.lt.s32.totalorder %s17, 5
      %s195 = scalar_select %p194, %s17, 5
      %s196 = smul.addr %s195, 2
      %s197 = scalar_lea.vmem %s2, %s196
      %p199 = scmp.eq.s32.totalorder %s18, 0
      // Predicated region
      $region29: #{csi_forward.2} parent=27 // pred_check
        %p200 = pneg %p199
      $region30: #{csi_forward.2} parent=27 // pred_check_branch
        %202 = sbr.rel (%p200) target = $region32
      $region31: #{csi_forward.2} parent=27 // pred_region
        %vm203 = vcmask 517120
        %204 = vst.msk [vmem:[%s197] sm:$0x3] %vm203, 0.0
      $region32: #{csi_forward.2} parent=27 // pred_fallthru
        _
      %v205 = vld [vmem:[%s197] sm:$0x3]
      %v206 = vld [vmem:[%s181] sm:$0x1]
      %v207 = vld [vmem:[%s190] sm:$0xf]
      %v208 = vld [vmem:[%s190 + $0x4] sm:$0xf]
      %v209 = vld [vmem:[%s190 + $0x8] sm:$0xf]
      %v210 = vld [vmem:[%s190 + $0xc] sm:$0xf]
      %v211 = vld [vmem:[%s190 + $0x10] sm:$0xf]
      %v212 = vld [vmem:[%s190 + $0x14] sm:$0xf]
      %v213 = vld [vmem:[%s190 + $0x18] sm:$0xf]
      %v214 = vld [vmem:[%s190 + $0x1c] sm:$0xf]
      %v215 = vld [vmem:[%s190 + $0x20] sm:$0xf]
      %v216 = vld [vmem:[%s190 + $0x24] sm:$0xf]
      %v217 = vld [vmem:[%s190 + $0x28] sm:$0xf]
      %v218 = vld [vmem:[%s190 + $0x2c] sm:$0xf]
      %v219 = vld [vmem:[%s190 + $0x30] sm:$0xf]
      %v220 = vld [vmem:[%s190 + $0x34] sm:$0xf]
      %v221 = vld [vmem:[%s190 + $0x38] sm:$0xf]
      %v222 = vld [vmem:[%s190 + $0x3c] sm:$0xf]
      %v239 = vunpack.c.l.b16 %v207
      %v240 = vunpack.c.l.b16 %v208
      %v241 = vunpack.c.l.b16 %v209
      %v242 = vunpack.c.l.b16 %v210
      %v243 = vunpack.c.l.b16 %v211
      %v244 = vunpack.c.l.b16 %v212
      %v245 = vunpack.c.l.b16 %v213
      %v246 = vunpack.c.l.b16 %v214
      %v247 = vunpack.c.l.b16 %v215
      %v248 = vunpack.c.l.b16 %v216
      %v249 = vunpack.c.l.b16 %v217
      %v250 = vunpack.c.l.b16 %v218
      %v251 = vunpack.c.l.b16 %v219
      %v252 = vunpack.c.l.b16 %v220
      %v253 = vunpack.c.l.b16 %v221
      %v254 = vunpack.c.l.b16 %v222
      %v255 = vpack.c.b16 %v240, %v239
      %v256 = vpack.c.b16 %v242, %v241
      %v257 = vpack.c.b16 %v244, %v243
      %v258 = vpack.c.b16 %v246, %v245
      %v259 = vpack.c.b16 %v248, %v247
      %v260 = vpack.c.b16 %v250, %v249
      %v261 = vpack.c.b16 %v252, %v251
      %v262 = vpack.c.b16 %v254, %v253
      %271 = vmatprep.subr.bf16.mxu0 0
      %272 = vmatpush1.bf16.msra.mxu0 %v262
      %273 = vmatprep.subr.bf16.mxu0 0
      %274 = vmatpush1.bf16.msra.mxu0 %v261
      %275 = vmatprep.subr.bf16.mxu0 0
      %276 = vmatpush1.bf16.msra.mxu0 %v260
      %277 = vmatprep.subr.bf16.mxu0 0
      %278 = vmatpush1.bf16.msra.mxu0 %v259
      %279 = vmatprep.subr.bf16.mxu0 0
      %280 = vmatpush1.bf16.msra.mxu0 %v258
      %281 = vmatprep.subr.bf16.mxu0 0
      %282 = vmatpush1.bf16.msra.mxu0 %v257
      %283 = vmatprep.subr.bf16.mxu0 0
      %284 = vmatpush1.bf16.msra.mxu0 %v256
      %285 = vmatprep.subr.bf16.mxu0 0
      %286 = vmatpush1.bf16.msra.mxu0 %v255
      %287 = vmatprep.subr.bf16.mxu0 0
      %288 = vmatpush2.bf16.msra.mxu0 0
      %289 = vmatprep.subr.bf16.mxu0 0
      %290 = vmatpush2.bf16.msra.mxu0 0
      %291 = vmatprep.subr.bf16.mxu0 0
      %292 = vmatpush2.bf16.msra.mxu0 0
      %293 = vmatprep.subr.bf16.mxu0 0
      %294 = vmatpush2.bf16.msra.mxu0 0
      %295 = vmatprep.subr.bf16.mxu0 0
      %296 = vmatpush2.bf16.msra.mxu0 0
      %297 = vmatprep.subr.bf16.mxu0 0
      %298 = vmatpush2.bf16.msra.mxu0 0
      %299 = vmatprep.subr.bf16.mxu0 0
      %300 = vmatpush2.bf16.msra.mxu0 0
      %301 = vmatprep.subr.bf16.mxu0 0
      %302 = vmatpush2.bf16.msra.mxu0 0
      %303 = vmatprep.mubr.bf16.mxu0 0
      %304 = vmatmul.mubr.bf16.gmra.mxu0 %v206
      %v305 = vpop.f32.mrf.mxu0
      %v306 = vadd.f32 0.0, %v305
      %v307 = vpop.f32.mrf.mxu0
      %v308 = vpop.f32.mrf.mxu0
      %v309 = vpop.f32.mrf.mxu0
      %310 = vdwg.mxu0
      %v311 = vadd.f32 %v205, %v306
      %vm312 = vcmask 517120
      %313 = vst.msk [vmem:[%s197] sm:$0x3] %vm312, %v311
      %p314 = scmp.lt.s32.totalorder %s17, 5
      %s315 = scalar_select %p314, %s17, 5
      %s316 = smul.addr %s315, 2
      %s317 = scalar_lea.vmem %s2, %s316
      // Predicated region
      $region33: #{csi_forward.2} parent=27 // pred_check
        %p318 = pneg %p103
      $region34: #{csi_forward.2} parent=27 // pred_check_branch
        %320 = sbr.rel (%p318) target = $region36
      $region35: #{csi_forward.2} parent=27 // pred_region
        _
      $region36: #{csi_forward.2} parent=27 // pred_fallthru
        _
    $region28: #{csi_forward.2} parent=5 // pred_fallthru
      _
    %p321 = scmp.le.s32.totalorder 2, %s8
    // Predicated region
    $region37: #{csi_forward.2} parent=5 // pred_check
      %p322 = pneg %p321
    $region38: #{csi_forward.2} parent=5 // pred_check_branch
      %324 = sbr.rel (%p322) target = $region40
    $region39: #{csi_forward.2} parent=5 // pred_region
      %s325 = ssub.s32 %s8, 2
      // Predicated region
      $region41: #{csi_forward.2} parent=39 // pred_check
        %p326 = pneg %p109
      $region42: #{csi_forward.2} parent=39 // pred_check_branch
        %328 = sbr.rel (%p326) target = $region44
      $region43: #{csi_forward.2} parent=39 // pred_region
        %p329 = scmp.lt.s32.totalorder %s19, 5
        %s330 = scalar_select %p329, %s19, 5
        %s331 = smul.addr %s330, 2
        %s332 = scalar_lea.vmem %s2, %s331
      $region44: #{csi_forward.2} parent=39 // pred_fallthru
        _
    $region40: #{csi_forward.2} parent=5 // pred_fallthru
      _
  $region6: #{csi_forward.2} parent=0 // loop_footer
    %s12 = sadd.s32 1, %s8
  $region7: #{csi_forward.2} parent=0 // loop_footer_branch
    %7 = sbr.rel target = $region3
  $region8: #{csi_forward.2} parent=0 // loop_exit
    _

// kernel: csi_forward.3
$region0: #{csi_forward.3}
  #allocation0 [shape = 'u32[]', space=smem, size = 0x4, offset = 0x4, fixed_abs, tag = 'smem constant byte address 0x4 - core index']
  #allocation1 [shape = 'u32[144,128]{1,0:T(1,128)}', space=vmem, size = 0x12000, scoped, tag = 'internal scratch']
  %s0 = inlined_call_operand.vmem [shape: f32[6,2,64], index: 0, kind: input, shape index: {}]
  %s1 = inlined_call_operand.vmem [shape: f32[6,64,5], index: 1, kind: input, shape index: {}]
  %s2 = inlined_call_operand.vmem [shape: f32[1,6,5], index: 2, kind: input, shape index: {}]
  %s3 = inlined_call_operand.vmem [shape: f32[1,1,64], index: 3, kind: input, shape index: {}]
  %s4 = inlined_call_operand.vmem [shape: f32[2,6,5], index: 4, kind: output, shape index: {}]
  %s5 = sld [smem:[#allocation0]]
  $region26: #{csi_forward.3} parent=0
    _
  %s7 = ssub.s32 1, %s5
  %s8 = scalar_select 0, %s7, %s5
  // Predicated region
  $region2: #{csi_forward.3} parent=0 // pred_check
    _
  $region3: #{csi_forward.3} parent=0 // pred_check_branch
    %10 = sbr.rel (0) target = $region5
  $region4: #{csi_forward.3} parent=0 // pred_region
    _
  $region5: #{csi_forward.3} parent=0 // pred_fallthru
    _
  // Predicated region
  $region6: #{csi_forward.3} parent=0 // pred_check
    _
  $region7: #{csi_forward.3} parent=0 // pred_check_branch
    %12 = sbr.rel (0) target = $region9
  $region8: #{csi_forward.3} parent=0 // pred_region
    _
  $region9: #{csi_forward.3} parent=0 // pred_fallthru
    _
  // Predicated region
  $region10: #{csi_forward.3} parent=0 // pred_check
    _
  $region11: #{csi_forward.3} parent=0 // pred_check_branch
    %14 = sbr.rel (0) target = $region13
  $region12: #{csi_forward.3} parent=0 // pred_region
    _
  $region13: #{csi_forward.3} parent=0 // pred_fallthru
    _
  // Predicated region
  $region14: #{csi_forward.3} parent=0 // pred_check
    _
  $region15: #{csi_forward.3} parent=0 // pred_check_branch
    %16 = sbr.rel (0) target = $region17
  $region16: #{csi_forward.3} parent=0 // pred_region
    _
  $region17: #{csi_forward.3} parent=0 // pred_fallthru
    _
  %v17 = vld [vmem:[%s0] sm:$0x3]
  %v18 = vld [vmem:[%s0 + $0x2] sm:$0x3]
  %v19 = vld [vmem:[%s0 + $0x4] sm:$0x3]
  %v20 = vld [vmem:[%s0 + $0x6] sm:$0x3]
  %v21 = vld [vmem:[%s0 + $0x8] sm:$0x3]
  %v22 = vld [vmem:[%s0 + $0xa] sm:$0x3]
  %vm23 = vcmask 517120
  %v24 = vsel %vm23, %v17, 0.0
  %v25 = vsel %vm23, %v18, 0.0
  %v26 = vadd.f32 %v24, %v25
  %v27 = vsel %vm23, %v19, 0.0
  %v28 = vadd.f32 %v26, %v27
  %v29 = vsel %vm23, %v20, 0.0
  %v30 = vadd.f32 %v28, %v29
  %v31 = vsel %vm23, %v21, 0.0
  %v32 = vadd.f32 %v30, %v31
  %v33 = vsel %vm23, %v22, 0.0
  %v34 = vadd.f32 %v32, %v33
  %v35 = vmul.f32 %v17, 0.7
  %v36 = vmul.f32 %v18, 0.7
  %v37 = vmul.f32 %v19, 0.7
  %v38 = vmul.f32 %v20, 0.7
  %v39 = vmul.f32 %v21, 0.7
  %v40 = vmul.f32 %v22, 0.7
  %v41 = vmul.f32 %v34, 0.15
  %v42 = vadd.f32 %v35, %v41
  %v43 = vadd.f32 %v36, %v41
  %v44 = vadd.f32 %v37, %v41
  %v45 = vadd.f32 %v38, %v41
  %v46 = vadd.f32 %v39, %v41
  %v47 = vadd.f32 %v40, %v41
  %v48 = vld [vmem:[%s3] sm:$0x1]
  %v50 = vlaneseq
  %v51 = vshrl.u32 %v50, 7
  %v52 = vsub.s32 0, %v51
  %v53 = vrot.slane %v48, %v52
  %v55 = vadd.f32 %v42, %v53
  %v56 = vadd.f32 %v43, %v53
  %v57 = vadd.f32 %v44, %v53
  %v58 = vadd.f32 %v45, %v53
  %v59 = vadd.f32 %v46, %v53
  %v60 = vadd.f32 %v47, %v53
  %v61 = vld [vmem:[%s1] sm:$0xff]
  %v62 = vld [vmem:[%s1 + $0x8] sm:$0xff]
  %v63 = vld [vmem:[%s1 + $0x10] sm:$0xff]
  %v64 = vld [vmem:[%s1 + $0x18] sm:$0xff]
  %v65 = vld [vmem:[%s1 + $0x20] sm:$0xff]
  %v66 = vld [vmem:[%s1 + $0x28] sm:$0xff]
  %v67 = vld [vmem:[%s1 + $0x30] sm:$0xff]
  %v68 = vld [vmem:[%s1 + $0x38] sm:$0xff]
  %v69 = vld [vmem:[%s1 + $0x40] sm:$0xff]
  %v70 = vld [vmem:[%s1 + $0x48] sm:$0xff]
  %v71 = vld [vmem:[%s1 + $0x50] sm:$0xff]
  %v72 = vld [vmem:[%s1 + $0x58] sm:$0xff]
  %v73 = vld [vmem:[%s1 + $0x60] sm:$0xff]
  %v74 = vld [vmem:[%s1 + $0x68] sm:$0xff]
  %v75 = vld [vmem:[%s1 + $0x70] sm:$0xff]
  %v76 = vld [vmem:[%s1 + $0x78] sm:$0xff]
  %v77 = vld [vmem:[%s1 + $0x80] sm:$0xff]
  %v78 = vld [vmem:[%s1 + $0x88] sm:$0xff]
  %v79 = vld [vmem:[%s1 + $0x90] sm:$0xff]
  %v80 = vld [vmem:[%s1 + $0x98] sm:$0xff]
  %v81 = vld [vmem:[%s1 + $0xa0] sm:$0xff]
  %v82 = vld [vmem:[%s1 + $0xa8] sm:$0xff]
  %v83 = vld [vmem:[%s1 + $0xb0] sm:$0xff]
  %v84 = vld [vmem:[%s1 + $0xb8] sm:$0xff]
  %v85 = vld [vmem:[%s1 + $0xc0] sm:$0xff]
  %v86 = vld [vmem:[%s1 + $0xc8] sm:$0xff]
  %v87 = vld [vmem:[%s1 + $0xd0] sm:$0xff]
  %v88 = vld [vmem:[%s1 + $0xd8] sm:$0xff]
  %v89 = vld [vmem:[%s1 + $0xe0] sm:$0xff]
  %v90 = vld [vmem:[%s1 + $0xe8] sm:$0xff]
  %v91 = vld [vmem:[%s1 + $0xf0] sm:$0xff]
  %v92 = vld [vmem:[%s1 + $0xf8] sm:$0xff]
  %v93 = vld [vmem:[%s1 + $0x100] sm:$0xff]
  %v94 = vld [vmem:[%s1 + $0x108] sm:$0xff]
  %v95 = vld [vmem:[%s1 + $0x110] sm:$0xff]
  %v96 = vld [vmem:[%s1 + $0x118] sm:$0xff]
  %v97 = vld [vmem:[%s1 + $0x120] sm:$0xff]
  %v98 = vld [vmem:[%s1 + $0x128] sm:$0xff]
  %v99 = vld [vmem:[%s1 + $0x130] sm:$0xff]
  %v100 = vld [vmem:[%s1 + $0x138] sm:$0xff]
  %v101 = vld [vmem:[%s1 + $0x140] sm:$0xff]
  %v102 = vld [vmem:[%s1 + $0x148] sm:$0xff]
  %v103 = vld [vmem:[%s1 + $0x150] sm:$0xff]
  %v104 = vld [vmem:[%s1 + $0x158] sm:$0xff]
  %v105 = vld [vmem:[%s1 + $0x160] sm:$0xff]
  %v106 = vld [vmem:[%s1 + $0x168] sm:$0xff]
  %v107 = vld [vmem:[%s1 + $0x170] sm:$0xff]
  %v108 = vld [vmem:[%s1 + $0x178] sm:$0xff]
  %vm109 = vcmask 523264
  %v111 = vsel %vm109, %v55, 0
  %113 = vmatprep.subr.mxu0 0.0
  %114 = vmatpush1.msra.mxu0 0.0
  %115 = vmatprep.subr.mxu0 0.0
  %116 = vmatpush1.msra.mxu0 0.0
  %117 = vmatprep.subr.mxu0 0.0
  %118 = vmatpush1.msra.mxu0 0.0
  %119 = vmatprep.subr.mxu0 0.0
  %120 = vmatpush1.msra.mxu0 0.0
  %121 = vmatprep.subr.mxu0 0.0
  %122 = vmatpush1.msra.mxu0 0.0
  %123 = vmatprep.subr.mxu0 0.0
  %124 = vmatpush1.msra.mxu0 0.0
  %125 = vmatprep.subr.mxu0 0.0
  %126 = vmatpush1.msra.mxu0 0.0
  %127 = vmatprep.subr.mxu0 0.0
  %128 = vmatpush1.msra.mxu0 0.0
  %129 = vmatprep.subr.mxu0 0.0
  %130 = vmatpush1.msra.mxu0 %v68
  %131 = vmatprep.subr.mxu0 0.0
  %132 = vmatpush1.msra.mxu0 %v67
  %133 = vmatprep.subr.mxu0 0.0
  %134 = vmatpush1.msra.mxu0 %v66
  %135 = vmatprep.subr.mxu0 0.0
  %136 = vmatpush1.msra.mxu0 %v65
  %137 = vmatprep.subr.mxu0 0.0
  %138 = vmatpush1.msra.mxu0 %v64
  %139 = vmatprep.subr.mxu0 0.0
  %140 = vmatpush1.msra.mxu0 %v63
  %141 = vmatprep.subr.mxu0 0.0
  %142 = vmatpush1.msra.mxu0 %v62
  %143 = vmatprep.subr.mxu0 0.0
  %144 = vmatpush1.msra.mxu0 %v61
  %145 = vmatprep.subr.mxu0 0.0
  %146 = vmatpush2.msra.mxu0 0.0
  %147 = vmatprep.subr.mxu0 0.0
  %148 = vmatpush2.msra.mxu0 0.0
  %149 = vmatprep.subr.mxu0 0.0
  %150 = vmatpush2.msra.mxu0 0.0
  %151 = vmatprep.subr.mxu0 0.0
  %152 = vmatpush2.msra.mxu0 0.0
  %153 = vmatprep.subr.mxu0 0.0
  %154 = vmatpush2.msra.mxu0 0.0
  %155 = vmatprep.subr.mxu0 0.0
  %156 = vmatpush2.msra.mxu0 0.0
  %157 = vmatprep.subr.mxu0 0.0
  %158 = vmatpush2.msra.mxu0 0.0
  %159 = vmatprep.subr.mxu0 0.0
  %160 = vmatpush2.msra.mxu0 0.0
  %161 = vmatprep.subr.mxu0 0.0
  %162 = vmatpush2.msra.mxu0 0.0
  %163 = vmatprep.subr.mxu0 0.0
  %164 = vmatpush2.msra.mxu0 0.0
  %165 = vmatprep.subr.mxu0 0.0
  %166 = vmatpush2.msra.mxu0 0.0
  %167 = vmatprep.subr.mxu0 0.0
  %168 = vmatpush2.msra.mxu0 0.0
  %169 = vmatprep.subr.mxu0 0.0
  %170 = vmatpush2.msra.mxu0 0.0
  %171 = vmatprep.subr.mxu0 0.0
  %172 = vmatpush2.msra.mxu0 0.0
  %173 = vmatprep.subr.mxu0 0.0
  %174 = vmatpush2.msra.mxu0 0.0
  %175 = vmatprep.subr.mxu0 0.0
  %176 = vmatpush2.msra.mxu0 0.0
  %177 = vmatprep.mubr.f32.mxu0 0.0
  %178 = vmatmul.mubr.f32.gmra.mxu0 %v111
  %v179 = vpop.f32.mrf.mxu0
  %v180 = vadd.f32 0.0, %v179
  %v181 = vpop.f32.mrf.mxu0
  %182 = vdwg.mxu0
  %v184 = vsel %vm109, %v56, 0
  %186 = vmatprep.subr.mxu0 0.0
  %187 = vmatpush1.msra.mxu0 0.0
  %188 = vmatprep.subr.mxu0 0.0
  %189 = vmatpush1.msra.mxu0 0.0
  %190 = vmatprep.subr.mxu0 0.0
  %191 = vmatpush1.msra.mxu0 0.0
  %192 = vmatprep.subr.mxu0 0.0
  %193 = vmatpush1.msra.mxu0 0.0
  %194 = vmatprep.subr.mxu0 0.0
  %195 = vmatpush1.msra.mxu0 0.0
  %196 = vmatprep.subr.mxu0 0.0
  %197 = vmatpush1.msra.mxu0 0.0
  %198 = vmatprep.subr.mxu0 0.0
  %199 = vmatpush1.msra.mxu0 0.0
  %200 = vmatprep.subr.mxu0 0.0
  %201 = vmatpush1.msra.mxu0 0.0
  %202 = vmatprep.subr.mxu0 0.0
  %203 = vmatpush1.msra.mxu0 %v76
  %204 = vmatprep.subr.mxu0 0.0
  %205 = vmatpush1.msra.mxu0 %v75
  %206 = vmatprep.subr.mxu0 0.0
  %207 = vmatpush1.msra.mxu0 %v74
  %208 = vmatprep.subr.mxu0 0.0
  %209 = vmatpush1.msra.mxu0 %v73
  %210 = vmatprep.subr.mxu0 0.0
  %211 = vmatpush1.msra.mxu0 %v72
  %212 = vmatprep.subr.mxu0 0.0
  %213 = vmatpush1.msra.mxu0 %v71
  %214 = vmatprep.subr.mxu0 0.0
  %215 = vmatpush1.msra.mxu0 %v70
  %216 = vmatprep.subr.mxu0 0.0
  %217 = vmatpush1.msra.mxu0 %v69
  %218 = vmatprep.subr.mxu0 0.0
  %219 = vmatpush2.msra.mxu0 0.0
  %220 = vmatprep.subr.mxu0 0.0
  %221 = vmatpush2.msra.mxu0 0.0
  %222 = vmatprep.subr.mxu0 0.0
  %223 = vmatpush2.msra.mxu0 0.0
  %224 = vmatprep.subr.mxu0 0.0
  %225 = vmatpush2.msra.mxu0 0.0
  %226 = vmatprep.subr.mxu0 0.0
  %227 = vmatpush2.msra.mxu0 0.0
  %228 = vmatprep.subr.mxu0 0.0
  %229 = vmatpush2.msra.mxu0 0.0
  %230 = vmatprep.subr.mxu0 0.0
  %231 = vmatpush2.msra.mxu0 0.0
  %232 = vmatprep.subr.mxu0 0.0
  %233 = vmatpush2.msra.mxu0 0.0
  %234 = vmatprep.subr.mxu0 0.0
  %235 = vmatpush2.msra.mxu0 0.0
  %236 = vmatprep.subr.mxu0 0.0
  %237 = vmatpush2.msra.mxu0 0.0
  %238 = vmatprep.subr.mxu0 0.0
  %239 = vmatpush2.msra.mxu0 0.0
  %240 = vmatprep.subr.mxu0 0.0
  %241 = vmatpush2.msra.mxu0 0.0
  %242 = vmatprep.subr.mxu0 0.0
  %243 = vmatpush2.msra.mxu0 0.0
  %244 = vmatprep.subr.mxu0 0.0
  %245 = vmatpush2.msra.mxu0 0.0
  %246 = vmatprep.subr.mxu0 0.0
  %247 = vmatpush2.msra.mxu0 0.0
  %248 = vmatprep.subr.mxu0 0.0
  %249 = vmatpush2.msra.mxu0 0.0
  %250 = vmatprep.mubr.f32.mxu0 0.0
  %251 = vmatmul.mubr.f32.gmra.mxu0 %v184
  %v252 = vpop.f32.mrf.mxu0
  %v253 = vadd.f32 0.0, %v252
  %v254 = vpop.f32.mrf.mxu0
  %255 = vdwg.mxu0
  %v257 = vsel %vm109, %v57, 0
  %259 = vmatprep.subr.mxu0 0.0
  %260 = vmatpush1.msra.mxu0 0.0
  %261 = vmatprep.subr.mxu0 0.0
  %262 = vmatpush1.msra.mxu0 0.0
  %263 = vmatprep.subr.mxu0 0.0
  %264 = vmatpush1.msra.mxu0 0.0
  %265 = vmatprep.subr.mxu0 0.0
  %266 = vmatpush1.msra.mxu0 0.0
  %267 = vmatprep.subr.mxu0 0.0
  %268 = vmatpush1.msra.mxu0 0.0
  %269 = vmatprep.subr.mxu0 0.0
  %270 = vmatpush1.msra.mxu0 0.0
  %271 = vmatprep.subr.mxu0 0.0
  %272 = vmatpush1.msra.mxu0 0.0
  %273 = vmatprep.subr.mxu0 0.0
  %274 = vmatpush1.msra.mxu0 0.0
  %275 = vmatprep.subr.mxu0 0.0
  %276 = vmatpush1.msra.mxu0 %v84
  %277 = vmatprep.subr.mxu0 0.0
  %278 = vmatpush1.msra.mxu0 %v83
  %279 = vmatprep.subr.mxu0 0.0
  %280 = vmatpush1.msra.mxu0 %v82
  %281 = vmatprep.subr.mxu0 0.0
  %282 = vmatpush1.msra.mxu0 %v81
  %283 = vmatprep.subr.mxu0 0.0
  %284 = vmatpush1.msra.mxu0 %v80
  %285 = vmatprep.subr.mxu0 0.0
  %286 = vmatpush1.msra.mxu0 %v79
  %287 = vmatprep.subr.mxu0 0.0
  %288 = vmatpush1.msra.mxu0 %v78
  %289 = vmatprep.subr.mxu0 0.0
  %290 = vmatpush1.msra.mxu0 %v77
  %291 = vmatprep.subr.mxu0 0.0
  %292 = vmatpush2.msra.mxu0 0.0
  %293 = vmatprep.subr.mxu0 0.0
  %294 = vmatpush2.msra.mxu0 0.0
  %295 = vmatprep.subr.mxu0 0.0
  %296 = vmatpush2.msra.mxu0 0.0
  %297 = vmatprep.subr.mxu0 0.0
  %298 = vmatpush2.msra.mxu0 0.0
  %299 = vmatprep.subr.mxu0 0.0
  %300 = vmatpush2.msra.mxu0 0.0
  %301 = vmatprep.subr.mxu0 0.0
  %302 = vmatpush2.msra.mxu0 0.0
  %303 = vmatprep.subr.mxu0 0.0
  %304 = vmatpush2.msra.mxu0 0.0
  %305 = vmatprep.subr.mxu0 0.0
  %306 = vmatpush2.msra.mxu0 0.0
  %307 = vmatprep.subr.mxu0 0.0
  %308 = vmatpush2.msra.mxu0 0.0
  %309 = vmatprep.subr.mxu0 0.0
  %310 = vmatpush2.msra.mxu0 0.0
  %311 = vmatprep.subr.mxu0 0.0
  %312 = vmatpush2.msra.mxu0 0.0
  %313 = vmatprep.subr.mxu0 0.0
  %314 = vmatpush2.msra.mxu0 0.0
  %315 = vmatprep.subr.mxu0 0.0
  %316 = vmatpush2.msra.mxu0 0.0
  %317 = vmatprep.subr.mxu0 0.0
  %318 = vmatpush2.msra.mxu0 0.0
  %319 = vmatprep.subr.mxu0 0.0
  %320 = vmatpush2.msra.mxu0 0.0
  %321 = vmatprep.subr.mxu0 0.0
  %322 = vmatpush2.msra.mxu0 0.0
  %323 = vmatprep.mubr.f32.mxu0 0.0
  %324 = vmatmul.mubr.f32.gmra.mxu0 %v257
  %v325 = vpop.f32.mrf.mxu0
  %v326 = vadd.f32 0.0, %v325
  %v327 = vpop.f32.mrf.mxu0
  %328 = vdwg.mxu0
  %v330 = vsel %vm109, %v58, 0
  %332 = vmatprep.subr.mxu0 0.0
  %333 = vmatpush1.msra.mxu0 0.0
  %334 = vmatprep.subr.mxu0 0.0
  %335 = vmatpush1.msra.mxu0 0.0
  %336 = vmatprep.subr.mxu0 0.0
  %337 = vmatpush1.msra.mxu0 0.0
  %338 = vmatprep.subr.mxu0 0.0
  %339 = vmatpush1.msra.mxu0 0.0
  %340 = vmatprep.subr.mxu0 0.0
  %341 = vmatpush1.msra.mxu0 0.0
  %342 = vmatprep.subr.mxu0 0.0
  %343 = vmatpush1.msra.mxu0 0.0
  %344 = vmatprep.subr.mxu0 0.0
  %345 = vmatpush1.msra.mxu0 0.0
  %346 = vmatprep.subr.mxu0 0.0
  %347 = vmatpush1.msra.mxu0 0.0
  %348 = vmatprep.subr.mxu0 0.0
  %349 = vmatpush1.msra.mxu0 %v92
  %350 = vmatprep.subr.mxu0 0.0
  %351 = vmatpush1.msra.mxu0 %v91
  %352 = vmatprep.subr.mxu0 0.0
  %353 = vmatpush1.msra.mxu0 %v90
  %354 = vmatprep.subr.mxu0 0.0
  %355 = vmatpush1.msra.mxu0 %v89
  %356 = vmatprep.subr.mxu0 0.0
  %357 = vmatpush1.msra.mxu0 %v88
  %358 = vmatprep.subr.mxu0 0.0
  %359 = vmatpush1.msra.mxu0 %v87
  %360 = vmatprep.subr.mxu0 0.0
  %361 = vmatpush1.msra.mxu0 %v86
  %362 = vmatprep.subr.mxu0 0.0
  %363 = vmatpush1.msra.mxu0 %v85
  %364 = vmatprep.subr.mxu0 0.0
  %365 = vmatpush2.msra.mxu0 0.0
  %366 = vmatprep.subr.mxu0 0.0
  %367 = vmatpush2.msra.mxu0 0.0
  %368 = vmatprep.subr.mxu0 0.0
  %369 = vmatpush2.msra.mxu0 0.0
  %370 = vmatprep.subr.mxu0 0.0
  %371 = vmatpush2.msra.mxu0 0.0
  %372 = vmatprep.subr.mxu0 0.0
  %373 = vmatpush2.msra.mxu0 0.0
  %374 = vmatprep.subr.mxu0 0.0
  %375 = vmatpush2.msra.mxu0 0.0
  %376 = vmatprep.subr.mxu0 0.0
  %377 = vmatpush2.msra.mxu0 0.0
  %378 = vmatprep.subr.mxu0 0.0
  %379 = vmatpush2.msra.mxu0 0.0
  %380 = vmatprep.subr.mxu0 0.0
  %381 = vmatpush2.msra.mxu0 0.0
  %382 = vmatprep.subr.mxu0 0.0
  %383 = vmatpush2.msra.mxu0 0.0
  %384 = vmatprep.subr.mxu0 0.0
  %385 = vmatpush2.msra.mxu0 0.0
  %386 = vmatprep.subr.mxu0 0.0
  %387 = vmatpush2.msra.mxu0 0.0
  %388 = vmatprep.subr.mxu0 0.0
  %389 = vmatpush2.msra.mxu0 0.0
  %390 = vmatprep.subr.mxu0 0.0
  %391 = vmatpush2.msra.mxu0 0.0
  %392 = vmatprep.subr.mxu0 0.0
  %393 = vmatpush2.msra.mxu0 0.0
  %394 = vmatprep.subr.mxu0 0.0
  %395 = vmatpush2.msra.mxu0 0.0
  %396 = vmatprep.mubr.f32.mxu0 0.0
  %397 = vmatmul.mubr.f32.gmra.mxu0 %v330
  %v398 = vpop.f32.mrf.mxu0
  %v399 = vadd.f32 0.0, %v398
  %v400 = vpop.f32.mrf.mxu0
  %401 = vdwg.mxu0
  %v403 = vsel %vm109, %v59, 0
  %405 = vmatprep.subr.mxu0 0.0
  %406 = vmatpush1.msra.mxu0 0.0
  %407 = vmatprep.subr.mxu0 0.0
  %408 = vmatpush1.msra.mxu0 0.0
  %409 = vmatprep.subr.mxu0 0.0
  %410 = vmatpush1.msra.mxu0 0.0
  %411 = vmatprep.subr.mxu0 0.0
  %412 = vmatpush1.msra.mxu0 0.0
  %413 = vmatprep.subr.mxu0 0.0
  %414 = vmatpush1.msra.mxu0 0.0
  %415 = vmatprep.subr.mxu0 0.0
  %416 = vmatpush1.msra.mxu0 0.0
  %417 = vmatprep.subr.mxu0 0.0
  %418 = vmatpush1.msra.mxu0 0.0
  %419 = vmatprep.subr.mxu0 0.0
  %420 = vmatpush1.msra.mxu0 0.0
  %421 = vmatprep.subr.mxu0 0.0
  %422 = vmatpush1.msra.mxu0 %v100
  %423 = vmatprep.subr.mxu0 0.0
  %424 = vmatpush1.msra.mxu0 %v99
  %425 = vmatprep.subr.mxu0 0.0
  %426 = vmatpush1.msra.mxu0 %v98
  %427 = vmatprep.subr.mxu0 0.0
  %428 = vmatpush1.msra.mxu0 %v97
  %429 = vmatprep.subr.mxu0 0.0
  %430 = vmatpush1.msra.mxu0 %v96
  %431 = vmatprep.subr.mxu0 0.0
  %432 = vmatpush1.msra.mxu0 %v95
  %433 = vmatprep.subr.mxu0 0.0
  %434 = vmatpush1.msra.mxu0 %v94
  %435 = vmatprep.subr.mxu0 0.0
  %436 = vmatpush1.msra.mxu0 %v93
  %437 = vmatprep.subr.mxu0 0.0
  %438 = vmatpush2.msra.mxu0 0.0
  %439 = vmatprep.subr.mxu0 0.0
  %440 = vmatpush2.msra.mxu0 0.0
  %441 = vmatprep.subr.mxu0 0.0
  %442 = vmatpush2.msra.mxu0 0.0
  %443 = vmatprep.subr.mxu0 0.0
  %444 = vmatpush2.msra.mxu0 0.0
  %445 = vmatprep.subr.mxu0 0.0
  %446 = vmatpush2.msra.mxu0 0.0
  %447 = vmatprep.subr.mxu0 0.0
  %448 = vmatpush2.msra.mxu0 0.0
  %449 = vmatprep.subr.mxu0 0.0
  %450 = vmatpush2.msra.mxu0 0.0
  %451 = vmatprep.subr.mxu0 0.0
  %452 = vmatpush2.msra.mxu0 0.0
  %453 = vmatprep.subr.mxu0 0.0
  %454 = vmatpush2.msra.mxu0 0.0
  %455 = vmatprep.subr.mxu0 0.0
  %456 = vmatpush2.msra.mxu0 0.0
  %457 = vmatprep.subr.mxu0 0.0
  %458 = vmatpush2.msra.mxu0 0.0
  %459 = vmatprep.subr.mxu0 0.0
  %460 = vmatpush2.msra.mxu0 0.0
  %461 = vmatprep.subr.mxu0 0.0
  %462 = vmatpush2.msra.mxu0 0.0
  %463 = vmatprep.subr.mxu0 0.0
  %464 = vmatpush2.msra.mxu0 0.0
  %465 = vmatprep.subr.mxu0 0.0
  %466 = vmatpush2.msra.mxu0 0.0
  %467 = vmatprep.subr.mxu0 0.0
  %468 = vmatpush2.msra.mxu0 0.0
  %469 = vmatprep.mubr.f32.mxu0 0.0
  %470 = vmatmul.mubr.f32.gmra.mxu0 %v403
  %v471 = vpop.f32.mrf.mxu0
  %v472 = vadd.f32 0.0, %v471
  %v473 = vpop.f32.mrf.mxu0
  %474 = vdwg.mxu0
  %v476 = vsel %vm109, %v60, 0
  %478 = vmatprep.subr.mxu0 0.0
  %479 = vmatpush1.msra.mxu0 0.0
  %480 = vmatprep.subr.mxu0 0.0
  %481 = vmatpush1.msra.mxu0 0.0
  %482 = vmatprep.subr.mxu0 0.0
  %483 = vmatpush1.msra.mxu0 0.0
  %484 = vmatprep.subr.mxu0 0.0
  %485 = vmatpush1.msra.mxu0 0.0
  %486 = vmatprep.subr.mxu0 0.0
  %487 = vmatpush1.msra.mxu0 0.0
  %488 = vmatprep.subr.mxu0 0.0
  %489 = vmatpush1.msra.mxu0 0.0
  %490 = vmatprep.subr.mxu0 0.0
  %491 = vmatpush1.msra.mxu0 0.0
  %492 = vmatprep.subr.mxu0 0.0
  %493 = vmatpush1.msra.mxu0 0.0
  %494 = vmatprep.subr.mxu0 0.0
  %495 = vmatpush1.msra.mxu0 %v108
  %496 = vmatprep.subr.mxu0 0.0
  %497 = vmatpush1.msra.mxu0 %v107
  %498 = vmatprep.subr.mxu0 0.0
  %499 = vmatpush1.msra.mxu0 %v106
  %500 = vmatprep.subr.mxu0 0.0
  %501 = vmatpush1.msra.mxu0 %v105
  %502 = vmatprep.subr.mxu0 0.0
  %503 = vmatpush1.msra.mxu0 %v104
  %504 = vmatprep.subr.mxu0 0.0
  %505 = vmatpush1.msra.mxu0 %v103
  %506 = vmatprep.subr.mxu0 0.0
  %507 = vmatpush1.msra.mxu0 %v102
  %508 = vmatprep.subr.mxu0 0.0
  %509 = vmatpush1.msra.mxu0 %v101
  %510 = vmatprep.subr.mxu0 0.0
  %511 = vmatpush2.msra.mxu0 0.0
  %512 = vmatprep.subr.mxu0 0.0
  %513 = vmatpush2.msra.mxu0 0.0
  %514 = vmatprep.subr.mxu0 0.0
  %515 = vmatpush2.msra.mxu0 0.0
  %516 = vmatprep.subr.mxu0 0.0
  %517 = vmatpush2.msra.mxu0 0.0
  %518 = vmatprep.subr.mxu0 0.0
  %519 = vmatpush2.msra.mxu0 0.0
  %520 = vmatprep.subr.mxu0 0.0
  %521 = vmatpush2.msra.mxu0 0.0
  %522 = vmatprep.subr.mxu0 0.0
  %523 = vmatpush2.msra.mxu0 0.0
  %524 = vmatprep.subr.mxu0 0.0
  %525 = vmatpush2.msra.mxu0 0.0
  %526 = vmatprep.subr.mxu0 0.0
  %527 = vmatpush2.msra.mxu0 0.0
  %528 = vmatprep.subr.mxu0 0.0
  %529 = vmatpush2.msra.mxu0 0.0
  %530 = vmatprep.subr.mxu0 0.0
  %531 = vmatpush2.msra.mxu0 0.0
  %532 = vmatprep.subr.mxu0 0.0
  %533 = vmatpush2.msra.mxu0 0.0
  %534 = vmatprep.subr.mxu0 0.0
  %535 = vmatpush2.msra.mxu0 0.0
  %536 = vmatprep.subr.mxu0 0.0
  %537 = vmatpush2.msra.mxu0 0.0
  %538 = vmatprep.subr.mxu0 0.0
  %539 = vmatpush2.msra.mxu0 0.0
  %540 = vmatprep.subr.mxu0 0.0
  %541 = vmatpush2.msra.mxu0 0.0
  %542 = vmatprep.mubr.f32.mxu0 0.0
  %543 = vmatmul.mubr.f32.gmra.mxu0 %v476
  %v544 = vpop.f32.mrf.mxu0
  %v545 = vadd.f32 0.0, %v544
  %v546 = vpop.f32.mrf.mxu0
  %547 = vdwg.mxu0
  %v550 = vunpack.c.l.s4 1966171168
  %v551 = vunpack.c.0.s8 %v550
  %v552 = vlaneseq
  %v553 = vshrl.u32 %v552, 7
  %v554 = vsub.s32 %v551, %v553
  %v555 = vrot.slane %v180, %v554
  %v556 = vcombine.high %v555, %v555
  %v558 = vunpack.c.l.s4 1966171168
  %v559 = vunpack.c.0.s8 %v558
  %v560 = vlaneseq
  %v561 = vshrl.u32 %v560, 7
  %v562 = vsub.s32 %v559, %v561
  %v563 = vrot.slane %v555, %v562
  %v565 = vunpack.c.l.s4 1966171168
  %v566 = vunpack.c.0.s8 %v565
  %v567 = vlaneseq
  %v568 = vshrl.u32 %v567, 7
  %v569 = vsub.s32 %v566, %v568
  %v570 = vrot.slane %v556, %v569
  %v575 = vunpack.c.l.s4 1966171168
  %v576 = vunpack.c.0.s8 %v575
  %v577 = vlaneseq
  %v578 = vshrl.u32 %v577, 7
  %v579 = vsub.s32 %v576, %v578
  %v580 = vrot.slane %v253, %v579
  %v581 = vcombine.high %v580, %v580
  %v583 = vunpack.c.l.s4 1966171168
  %v584 = vunpack.c.0.s8 %v583
  %v585 = vlaneseq
  %v586 = vshrl.u32 %v585, 7
  %v587 = vsub.s32 %v584, %v586
  %v588 = vrot.slane %v580, %v587
  %v590 = vunpack.c.l.s4 1966171168
  %v591 = vunpack.c.0.s8 %v590
  %v592 = vlaneseq
  %v593 = vshrl.u32 %v592, 7
  %v594 = vsub.s32 %v591, %v593
  %v595 = vrot.slane %v581, %v594
  %v598 = vunpack.c.l.s4 1966171168
  %v599 = vunpack.c.0.s8 %v598
  %v600 = vlaneseq
  %v601 = vshrl.u32 %v600, 7
  %v602 = vsub.s32 %v599, %v601
  %v603 = vrot.slane %v326, %v602
  %v604 = vcombine.high %v603, %v603
  %v606 = vunpack.c.l.s4 1966171168
  %v607 = vunpack.c.0.s8 %v606
  %v608 = vlaneseq
  %v609 = vshrl.u32 %v608, 7
  %v610 = vsub.s32 %v607, %v609
  %v611 = vrot.slane %v603, %v610
  %v613 = vunpack.c.l.s4 1966171168
  %v614 = vunpack.c.0.s8 %v613
  %v615 = vlaneseq
  %v616 = vshrl.u32 %v615, 7
  %v617 = vsub.s32 %v614, %v616
  %v618 = vrot.slane %v604, %v617
  %v621 = vunpack.c.l.s4 1966171168
  %v622 = vunpack.c.0.s8 %v621
  %v623 = vlaneseq
  %v624 = vshrl.u32 %v623, 7
  %v625 = vsub.s32 %v622, %v624
  %v626 = vrot.slane %v399, %v625
  %v627 = vcombine.high %v626, %v626
  %v629 = vunpack.c.l.s4 1966171168
  %v630 = vunpack.c.0.s8 %v629
  %v631 = vlaneseq
  %v632 = vshrl.u32 %v631, 7
  %v633 = vsub.s32 %v630, %v632
  %v634 = vrot.slane %v626, %v633
  %v636 = vunpack.c.l.s4 1966171168
  %v637 = vunpack.c.0.s8 %v636
  %v638 = vlaneseq
  %v639 = vshrl.u32 %v638, 7
  %v640 = vsub.s32 %v637, %v639
  %v641 = vrot.slane %v627, %v640
  %v644 = vunpack.c.l.s4 1966171168
  %v645 = vunpack.c.0.s8 %v644
  %v646 = vlaneseq
  %v647 = vshrl.u32 %v646, 7
  %v648 = vsub.s32 %v645, %v647
  %v649 = vrot.slane %v472, %v648
  %v650 = vcombine.high %v649, %v649
  %v652 = vunpack.c.l.s4 1966171168
  %v653 = vunpack.c.0.s8 %v652
  %v654 = vlaneseq
  %v655 = vshrl.u32 %v654, 7
  %v656 = vsub.s32 %v653, %v655
  %v657 = vrot.slane %v649, %v656
  %v659 = vunpack.c.l.s4 1966171168
  %v660 = vunpack.c.0.s8 %v659
  %v661 = vlaneseq
  %v662 = vshrl.u32 %v661, 7
  %v663 = vsub.s32 %v660, %v662
  %v664 = vrot.slane %v650, %v663
  %v667 = vunpack.c.l.s4 1966171168
  %v668 = vunpack.c.0.s8 %v667
  %v669 = vlaneseq
  %v670 = vshrl.u32 %v669, 7
  %v671 = vsub.s32 %v668, %v670
  %v672 = vrot.slane %v545, %v671
  %v673 = vcombine.high %v672, %v672
  %v675 = vunpack.c.l.s4 1966171168
  %v676 = vunpack.c.0.s8 %v675
  %v677 = vlaneseq
  %v678 = vshrl.u32 %v677, 7
  %v679 = vsub.s32 %v676, %v678
  %v680 = vrot.slane %v672, %v679
  %v682 = vunpack.c.l.s4 1966171168
  %v683 = vunpack.c.0.s8 %v682
  %v684 = vlaneseq
  %v685 = vshrl.u32 %v684, 7
  %v686 = vsub.s32 %v683, %v685
  %v687 = vrot.slane %v673, %v686
  %v688 = vlaneseq
  %v689 = vshrl.u32 %v688, 7
  %v690 = vsub.s32 0, %v689
  %v691 = vrot.slane %v588, %v690
  %v692 = vlaneseq
  %v693 = vshrl.u32 %v692, 7
  %v694 = vsub.s32 0, %v693
  %v695 = vrot.slane %v595, %v694
  %v698 = vlaneseq
  %v699 = vshrl.u32 %v698, 7
  %v700 = vsub.s32 0, %v699
  %v701 = vrot.slane %v611, %v700
  %v702 = vlaneseq
  %v703 = vshrl.u32 %v702, 7
  %v704 = vsub.s32 0, %v703
  %v705 = vrot.slane %v618, %v704
  %v708 = vlaneseq
  %v709 = vshrl.u32 %v708, 7
  %v710 = vsub.s32 0, %v709
  %v711 = vrot.slane %v634, %v710
  %v712 = vlaneseq
  %v713 = vshrl.u32 %v712, 7
  %v714 = vsub.s32 0, %v713
  %v715 = vrot.slane %v641, %v714
  %v718 = vlaneseq
  %v719 = vshrl.u32 %v718, 7
  %v720 = vsub.s32 0, %v719
  %v721 = vrot.slane %v657, %v720
  %v722 = vlaneseq
  %v723 = vshrl.u32 %v722, 7
  %v724 = vsub.s32 0, %v723
  %v725 = vrot.slane %v664, %v724
  %v728 = vlaneseq
  %v729 = vshrl.u32 %v728, 7
  %v730 = vsub.s32 0, %v729
  %v731 = vrot.slane %v680, %v730
  %v732 = vlaneseq
  %v733 = vshrl.u32 %v732, 7
  %v734 = vsub.s32 0, %v733
  %v735 = vrot.slane %v687, %v734
  %vm738 = vcmask 1040384
  %v739 = vsel %vm738, %v563, %v691
  %v740 = vsel %vm738, %v570, %v695
  %vm741 = vcmask 1041408
  %v742 = vsel %vm741, %v739, %v701
  %v743 = vsel %vm741, %v740, %v705
  %vm744 = vcmask 1042432
  %v745 = vsel %vm744, %v742, %v711
  %v746 = vsel %vm744, %v743, %v715
  %vm747 = vcmask 1043456
  %v748 = vsel %vm747, %v745, %v721
  %v749 = vsel %vm747, %v746, %v725
  %vm750 = vcmask 1044480
  %v751 = vsel %vm750, %v748, %v731
  %v752 = vsel %vm750, %v749, %v735
  %v753 = vld [vmem:[%s2] sm:$0x3f]
  %v754 = vadd.f32 %v751, %v753
  %v755 = vadd.f32 %v752, %v753
  %vm756 = vcmask 37888
  %757 = vst.msk [vmem:[%s4] sm:$0x3f] %vm756, %v754
  %758 = vst.msk [vmem:[%s4 + $0x8] sm:$0x3f] %vm756, %v755
  // Predicated region
  $region18: #{csi_forward.3} parent=0 // pred_check
    _
  $region19: #{csi_forward.3} parent=0 // pred_check_branch
    %760 = sbr.rel (0) target = $region21
  $region20: #{csi_forward.3} parent=0 // pred_region
    _
  $region21: #{csi_forward.3} parent=0 // pred_fallthru
    _
  // Predicated region
  $region22: #{csi_forward.3} parent=0 // pred_check
    _
  $region23: #{csi_forward.3} parent=0 // pred_check_branch
    %762 = sbr.rel (0) target = $region25
  $region24: #{csi_forward.3} parent=0 // pred_region
    _
  $region25: #{csi_forward.3} parent=0 // pred_fallthru
    _

</llo_original>
